<compile_context>
chip_gen: v7x
topology: tpu7x:2x2x1
jax: 0.10.0
libtpu: 0.0.40
codegen_flags: <defaults>
</compile_context>

<pallas_src>
import functools

import jax
import jax.numpy as jnp
from jax.experimental import pallas as pl
from jax.experimental.pallas import tpu as pltpu

LANE = 128  # TPU lane width; layer-2 output is padded to this so stores are unmasked.


def mlp_kernel(x_ref, w1t_ref, b1_ref, w2t_ref, b2_ref, o_ref):
    # x_ref:   (TB, V)      streamed batch tile
    # w1t_ref: (V, H1)      layer-1 weight, pre-transposed (y = x @ W1.T == x @ w1t)
    # b1_ref:  (1, H1)
    # w2t_ref: (H1, LANE)   layer-2 weight, pre-transposed, zero-padded to lane width
    # b2_ref:  (1, LANE)    layer-2 bias, zero-padded to lane width
    # o_ref:   (TB, LANE)   lane-dense padded output tile
    h = jnp.dot(x_ref[...], w1t_ref[...], preferred_element_type=jnp.float32) + b1_ref[...]
    h = jnp.maximum(h, 0.0)  # ReLU
    out = jnp.dot(h, w2t_ref[...], preferred_element_type=jnp.float32) + b2_ref[...]
    o_ref[...] = out.astype(o_ref.dtype)


@functools.partial(jax.jit, static_argnames=("block_batch",))
def simple_mlp(x, w1, b1, w2, b2, *, block_batch=512):
    """y = relu(x @ W1.T + b1) @ W2.T + b2, PyTorch nn.Linear weight layout W:[out,in]."""
    B, V = x.shape
    H1 = w1.shape[0]
    H2 = w2.shape[0]

    # --- Static weight prep (trace-time; free relative to the kernel) ---
    w1t = w1.T.astype(jnp.float32)                               # (V, H1)
    b1r = b1.reshape(1, H1).astype(jnp.float32)                  # (1, H1)
    # Lane-dense output: pad out-dim (H2=2) to 128 so the final store is a full `vst`.
    w2t = jnp.zeros((H1, LANE), jnp.float32).at[:, :H2].set(w2.T)
    b2r = jnp.zeros((1, LANE), jnp.float32).at[:, :H2].set(b2)

    # --- Batch tiling: biggest tile up to block_batch, rounded to sublane (8) granularity ---
    tb = min(block_batch, max(8, ((B + 7) // 8) * 8))
    b_pad = pl.cdiv(B, tb) * tb
    if b_pad != B:
        x = jnp.pad(x, ((0, b_pad - B), (0, 0)))  # padded rows are sliced off below

    out_pad = pl.pallas_call(
        mlp_kernel,
        out_shape=jax.ShapeDtypeStruct((b_pad, LANE), jnp.float32),
        grid=(b_pad // tb,),
        in_specs=[
            pl.BlockSpec((tb, V), lambda i: (i, 0)),        # x: streamed, auto double-buffered
            pl.BlockSpec((V, H1), lambda i: (0, 0)),        # weights/biases stay VMEM-resident
            pl.BlockSpec((1, H1), lambda i: (0, 0)),
            pl.BlockSpec((H1, LANE), lambda i: (0, 0)),
            pl.BlockSpec((1, LANE), lambda i: (0, 0)),
        ],
        out_specs=pl.BlockSpec((tb, LANE), lambda i: (i, 0)),
        compiler_params=pltpu.CompilerParams(
            dimension_semantics=("parallel",),              # shard batch grid across TCs (v7x)
        ),
    )(x, w1t, b1r, w2t, b2r)

    return out_pad[:B, :H2]


def init_params(key, vec_length=16, hidden_unit_1=8, hidden_unit_2=2):
    # Deterministic init mimicking PyTorch nn.Linear default (uniform in +/- 1/sqrt(fan_in)).
    k1, k2, k3, k4 = jax.random.split(key, 4)
    bound1 = 1.0 / jnp.sqrt(vec_length)
    bound2 = 1.0 / jnp.sqrt(hidden_unit_1)
    w1 = jax.random.uniform(k1, (hidden_unit_1, vec_length), jnp.float32, -bound1, bound1)
    b1 = jax.random.uniform(k2, (hidden_unit_1,), jnp.float32, -bound1, bound1)
    w2 = jax.random.uniform(k3, (hidden_unit_2, hidden_unit_1), jnp.float32, -bound2, bound2)
    b2 = jax.random.uniform(k4, (hidden_unit_2,), jnp.float32, -bound2, bound2)
    return w1, b1, w2, b2


if __name__ == "__main__":
    vec_length, hidden_unit_1, hidden_unit_2 = 16, 8, 2
    batch_size = 4

    key = jax.random.PRNGKey(0)
    key_x, key_p = jax.random.split(key)
    x = jax.random.normal(key_x, (batch_size, vec_length), dtype=jnp.float32)
    w1, b1, w2, b2 = init_params(key_p, vec_length, hidden_unit_1, hidden_unit_2)

    out = simple_mlp(x, w1, b1, w2, b2)
    jax.block_until_ready(out)

    # Pure-JAX reference check.
    ref = jnp.maximum(x @ w1.T + b1, 0.0) @ w2.T + b2
    assert out.shape == (batch_size, hidden_unit_2)
    assert jnp.allclose(out, ref, atol=1e-5, rtol=1e-5)

    print("KERNEL_OK")
</pallas_src>

<mosaic_0001>
module attributes {stable_mosaic.version = 11 : i64} {
  func.func @mlp_kernel(%arg0: i32, %arg1: memref<8x16xf32, #tpu.memory_space<vmem>>, %arg2: memref<16x8xf32, #tpu.memory_space<vmem>>, %arg3: memref<1x8xf32, #tpu.memory_space<vmem>>, %arg4: memref<8x128xf32, #tpu.memory_space<vmem>>, %arg5: memref<1x128xf32, #tpu.memory_space<vmem>>, %arg6: memref<8x128xf32, #tpu.memory_space<vmem>>) attributes {dimension_semantics = [#tpu.dimension_semantics<parallel>], iteration_bounds = array<i64: 1>, scalar_prefetch = 0 : i64, scratch_operands = 0 : i64, tpu.core_type = #tpu.core_type<tc>, window_params = [{transform_indices = @transform_0, window_bounds = array<i64: 8, 16>}, {pipeline_mode = #tpu.pipeline_mode<synchronous>, transform_indices = @transform_1, window_bounds = array<i64: 16, 8>}, {pipeline_mode = #tpu.pipeline_mode<synchronous>, transform_indices = @transform_2, window_bounds = array<i64: 1, 8>}, {pipeline_mode = #tpu.pipeline_mode<synchronous>, transform_indices = @transform_3, window_bounds = array<i64: 8, 128>}, {pipeline_mode = #tpu.pipeline_mode<synchronous>, transform_indices = @transform_4, window_bounds = array<i64: 1, 128>}, {transform_indices = @transform_5, window_bounds = array<i64: 8, 128>}]} {
    %c0 = arith.constant 0 : index
    %c0_0 = arith.constant 0 : index
    %0 = vector.load %arg1[%c0, %c0_0] : memref<8x16xf32, #tpu.memory_space<vmem>>, vector<8x16xf32>
    %c0_1 = arith.constant 0 : index
    %c0_2 = arith.constant 0 : index
    %1 = vector.load %arg2[%c0_1, %c0_2] : memref<16x8xf32, #tpu.memory_space<vmem>>, vector<16x8xf32>
    %cst = arith.constant dense<0.000000e+00> : vector<8x8xf32>
    %2 = tpu.matmul %0, %1, %cst {dimension_numbers = #tpu.dot_dimension_numbers<[1], [0], [0], [1], [0, 0, 1, 1], [], []>} : vector<8x16xf32>, vector<16x8xf32>, vector<8x8xf32> -> vector<8x8xf32>
    %c0_3 = arith.constant 0 : index
    %c0_4 = arith.constant 0 : index
    %3 = vector.load %arg3[%c0_3, %c0_4] : memref<1x8xf32, #tpu.memory_space<vmem>>, vector<1x8xf32>
    %4 = vector.broadcast %3 : vector<1x8xf32> to vector<8x8xf32>
    %5 = arith.addf %2, %4 : vector<8x8xf32>
    %cst_5 = arith.constant 0.000000e+00 : f32
    %6 = vector.broadcast %cst_5 : f32 to vector<8x8xf32>
    %7 = arith.maximumf %5, %6 : vector<8x8xf32>
    %c0_6 = arith.constant 0 : index
    %c0_7 = arith.constant 0 : index
    %8 = vector.load %arg4[%c0_6, %c0_7] : memref<8x128xf32, #tpu.memory_space<vmem>>, vector<8x128xf32>
    %cst_8 = arith.constant dense<0.000000e+00> : vector<8x128xf32>
    %9 = tpu.matmul %7, %8, %cst_8 {dimension_numbers = #tpu.dot_dimension_numbers<[1], [0], [0], [1], [0, 0, 1, 1], [], []>} : vector<8x8xf32>, vector<8x128xf32>, vector<8x128xf32> -> vector<8x128xf32>
    %c0_9 = arith.constant 0 : index
    %c0_10 = arith.constant 0 : index
    %10 = vector.load %arg5[%c0_9, %c0_10] : memref<1x128xf32, #tpu.memory_space<vmem>>, vector<1x128xf32>
    %11 = vector.broadcast %10 : vector<1x128xf32> to vector<8x128xf32>
    %12 = arith.addf %9, %11 : vector<8x128xf32>
    %c0_11 = arith.constant 0 : index
    %c0_12 = arith.constant 0 : index
    %13 = vector.load %arg6[%c0_11, %c0_12] : memref<8x128xf32, #tpu.memory_space<vmem>>, vector<8x128xf32>
    tpu.vector_store %arg6[%c0_11, %c0_12], %12 {strides = array<i32>} : memref<8x128xf32, #tpu.memory_space<vmem>>, vector<8x128xf32>,
    return
  }
  func.func @transform_0(%arg0: i32) -> (i32, i32) {
    %c0_i32 = arith.constant 0 : i32
    %c0_i32_0 = arith.constant 0 : i32
    return %arg0, %c0_i32 : i32, i32
  }
  func.func @transform_1(%arg0: i32) -> (i32, i32) {
    %c0_i32 = arith.constant 0 : i32
    %c0_i32_0 = arith.constant 0 : i32
    %c0_i32_1 = arith.constant 0 : i32
    return %c0_i32, %c0_i32_0 : i32, i32
  }
  func.func @transform_2(%arg0: i32) -> (i32, i32) {
    %c0_i32 = arith.constant 0 : i32
    %c0_i32_0 = arith.constant 0 : i32
    %c0_i32_1 = arith.constant 0 : i32
    return %c0_i32, %c0_i32_0 : i32, i32
  }
  func.func @transform_3(%arg0: i32) -> (i32, i32) {
    %c0_i32 = arith.constant 0 : i32
    %c0_i32_0 = arith.constant 0 : i32
    %c0_i32_1 = arith.constant 0 : i32
    return %c0_i32, %c0_i32_0 : i32, i32
  }
  func.func @transform_4(%arg0: i32) -> (i32, i32) {
    %c0_i32 = arith.constant 0 : i32
    %c0_i32_0 = arith.constant 0 : i32
    %c0_i32_1 = arith.constant 0 : i32
    return %c0_i32, %c0_i32_0 : i32, i32
  }
  func.func @transform_5(%arg0: i32) -> (i32, i32) {
    %c0_i32 = arith.constant 0 : i32
    %c0_i32_0 = arith.constant 0 : i32
    return %arg0, %c0_i32 : i32, i32
  }
}

</mosaic_0001>

<llo_original>
// kernel: simple_mlp.1
$region0: #{simple_mlp.1}
  #allocation0 [shape = 'u32[]', space=smem, size = 0x4, offset = 0x4, fixed_abs, tag = 'smem constant byte address 0x4 - core index']
  #allocation1 [shape = 'u32[144,128]{1,0:T(1,128)}', space=vmem, size = 0x12000, scoped, tag = 'internal scratch']
  %s0 = inlined_call_operand.vmem [shape: f32[8,16], index: 0, kind: input, shape index: {}]
  %s1 = inlined_call_operand.vmem [shape: f32[16,8], index: 1, kind: input, shape index: {}]
  %s2 = inlined_call_operand.vmem [shape: f32[1,8], index: 2, kind: input, shape index: {}]
  %s3 = inlined_call_operand.vmem [shape: f32[8,128], index: 3, kind: input, shape index: {}]
  %s4 = inlined_call_operand.vmem [shape: f32[1,128], index: 4, kind: input, shape index: {}]
  %s5 = inlined_call_operand.vmem [shape: f32[8,128], index: 5, kind: output, shape index: {}]
  %s6 = sld [smem:[#allocation0]]
  $region30: #{simple_mlp.1} parent=0
    _
  %s8 = ssub.s32 1, %s6
  %s9 = scalar_select 0, %s8, %s6
  // Predicated region
  $region2: #{simple_mlp.1} parent=0 // pred_check
    _
  $region3: #{simple_mlp.1} parent=0 // pred_check_branch
    %11 = sbr.rel (0) target = $region5
  $region4: #{simple_mlp.1} parent=0 // pred_region
    _
  $region5: #{simple_mlp.1} parent=0 // pred_fallthru
    _
  // Predicated region
  $region6: #{simple_mlp.1} parent=0 // pred_check
    _
  $region7: #{simple_mlp.1} parent=0 // pred_check_branch
    %13 = sbr.rel (0) target = $region9
  $region8: #{simple_mlp.1} parent=0 // pred_region
    _
  $region9: #{simple_mlp.1} parent=0 // pred_fallthru
    _
  // Predicated region
  $region10: #{simple_mlp.1} parent=0 // pred_check
    _
  $region11: #{simple_mlp.1} parent=0 // pred_check_branch
    %15 = sbr.rel (0) target = $region13
  $region12: #{simple_mlp.1} parent=0 // pred_region
    _
  $region13: #{simple_mlp.1} parent=0 // pred_fallthru
    _
  // Predicated region
  $region14: #{simple_mlp.1} parent=0 // pred_check
    _
  $region15: #{simple_mlp.1} parent=0 // pred_check_branch
    %17 = sbr.rel (0) target = $region17
  $region16: #{simple_mlp.1} parent=0 // pred_region
    _
  $region17: #{simple_mlp.1} parent=0 // pred_fallthru
    _
  // Predicated region
  $region18: #{simple_mlp.1} parent=0 // pred_check
    _
  $region19: #{simple_mlp.1} parent=0 // pred_check_branch
    %19 = sbr.rel (0) target = $region21
  $region20: #{simple_mlp.1} parent=0 // pred_region
    _
  $region21: #{simple_mlp.1} parent=0 // pred_fallthru
    _
  %v20 = vld [vmem:[%s0] sm:$0xff]
  %v21 = vld [vmem:[%s1] sm:$0xff]
  %v22 = vld [vmem:[%s1 + $0x8] sm:$0xff]
  %v23 = vld [vmem:[%s2] sm:$0x1]
  %v25 = vlaneseq
  %v26 = vshrl.u32 %v25, 7
  %v27 = vsub.s32 0, %v26
  %v28 = vrot.slane %v23, %v27
  %vm30 = vcmask 130048
  %v32 = vsel %vm30, %v20, 0
  %34 = vmatprep.subr.mxu0 0.0
  %35 = vmatpush1.msra.mxu0 %v21
  %36 = vmatprep.subr.mxu0 0.0
  %37 = vmatpush1.msra.mxu0 %v22
  %38 = vmatprep.subr.mxu0 0.0
  %39 = vmatpush1.msra.mxu0 0.0
  %40 = vmatprep.subr.mxu0 0.0
  %41 = vmatpush1.msra.mxu0 0.0
  %42 = vmatprep.subr.mxu0 0.0
  %43 = vmatpush1.msra.mxu0 0.0
  %44 = vmatprep.subr.mxu0 0.0
  %45 = vmatpush1.msra.mxu0 0.0
  %46 = vmatprep.subr.mxu0 0.0
  %47 = vmatpush1.msra.mxu0 0.0
  %48 = vmatprep.subr.mxu0 0.0
  %49 = vmatpush1.msra.mxu0 0.0
  %50 = vmatprep.subr.mxu0 0.0
  %51 = vmatpush1.msra.mxu0 0.0
  %52 = vmatprep.subr.mxu0 0.0
  %53 = vmatpush1.msra.mxu0 0.0
  %54 = vmatprep.subr.mxu0 0.0
  %55 = vmatpush1.msra.mxu0 0.0
  %56 = vmatprep.subr.mxu0 0.0
  %57 = vmatpush1.msra.mxu0 0.0
  %58 = vmatprep.subr.mxu0 0.0
  %59 = vmatpush1.msra.mxu0 0.0
  %60 = vmatprep.subr.mxu0 0.0
  %61 = vmatpush1.msra.mxu0 0.0
  %62 = vmatprep.subr.mxu0 0.0
  %63 = vmatpush1.msra.mxu0 0.0
  %64 = vmatprep.subr.mxu0 0.0
  %65 = vmatpush1.msra.mxu0 0.0
  %66 = vmatprep.subr.mxu0 0.0
  %67 = vmatpush1.msra.mxu0 0.0
  %68 = vmatprep.subr.mxu0 0.0
  %69 = vmatpush1.msra.mxu0 0.0
  %70 = vmatprep.subr.mxu0 0.0
  %71 = vmatpush1.msra.mxu0 0.0
  %72 = vmatprep.subr.mxu0 0.0
  %73 = vmatpush1.msra.mxu0 0.0
  %74 = vmatprep.subr.mxu0 0.0
  %75 = vmatpush1.msra.mxu0 0.0
  %76 = vmatprep.subr.mxu0 0.0
  %77 = vmatpush1.msra.mxu0 0.0
  %78 = vmatprep.subr.mxu0 0.0
  %79 = vmatpush1.msra.mxu0 0.0
  %80 = vmatprep.subr.mxu0 0.0
  %81 = vmatpush1.msra.mxu0 0.0
  %82 = vmatprep.subr.mxu0 0.0
  %83 = vmatpush1.msra.mxu0 0.0
  %84 = vmatprep.subr.mxu0 0.0
  %85 = vmatpush1.msra.mxu0 0.0
  %86 = vmatprep.subr.mxu0 0.0
  %87 = vmatpush1.msra.mxu0 0.0
  %88 = vmatprep.subr.mxu0 0.0
  %89 = vmatpush1.msra.mxu0 0.0
  %90 = vmatprep.subr.mxu0 0.0
  %91 = vmatpush1.msra.mxu0 0.0
  %92 = vmatprep.subr.mxu0 0.0
  %93 = vmatpush1.msra.mxu0 0.0
  %94 = vmatprep.subr.mxu0 0.0
  %95 = vmatpush1.msra.mxu0 0.0
  %96 = vmatprep.subr.mxu0 0.0
  %97 = vmatpush1.msra.mxu0 0.0
  %98 = vmatprep.mubr.f32.mxu0 0.0
  %99 = vmatmul.mubr.f32.gmra.mrb[0].mxu0 %v32
  %v100 = vpop.f32.mrb[0].mxu0
  %v101 = vadd.f32 %v28, %v100
  %v102 = vpop.f32.mrb[0].mxu0
  %103 = vdwg.mxu0
  %v104 = vmax.f32 %v101, 0.0
  %v105 = vld [vmem:[%s3] sm:$0xff]
  %v106 = vld [vmem:[%s4] sm:$0x1]
  %v108 = vlaneseq
  %v109 = vshrl.u32 %v108, 7
  %v110 = vsub.s32 0, %v109
  %v111 = vrot.slane %v106, %v110
  %vm113 = vcmask 64512
  %v115 = vsel %vm113, %v104, 0
  %117 = vmatprep.subr.mxu0 0.0
  %118 = vmatpush1.msra.mxu0 %v105
  %119 = vmatprep.subr.mxu0 0.0
  %120 = vmatpush1.msra.mxu0 0.0
  %121 = vmatprep.subr.mxu0 0.0
  %122 = vmatpush1.msra.mxu0 0.0
  %123 = vmatprep.subr.mxu0 0.0
  %124 = vmatpush1.msra.mxu0 0.0
  %125 = vmatprep.subr.mxu0 0.0
  %126 = vmatpush1.msra.mxu0 0.0
  %127 = vmatprep.subr.mxu0 0.0
  %128 = vmatpush1.msra.mxu0 0.0
  %129 = vmatprep.subr.mxu0 0.0
  %130 = vmatpush1.msra.mxu0 0.0
  %131 = vmatprep.subr.mxu0 0.0
  %132 = vmatpush1.msra.mxu0 0.0
  %133 = vmatprep.subr.mxu0 0.0
  %134 = vmatpush1.msra.mxu0 0.0
  %135 = vmatprep.subr.mxu0 0.0
  %136 = vmatpush1.msra.mxu0 0.0
  %137 = vmatprep.subr.mxu0 0.0
  %138 = vmatpush1.msra.mxu0 0.0
  %139 = vmatprep.subr.mxu0 0.0
  %140 = vmatpush1.msra.mxu0 0.0
  %141 = vmatprep.subr.mxu0 0.0
  %142 = vmatpush1.msra.mxu0 0.0
  %143 = vmatprep.subr.mxu0 0.0
  %144 = vmatpush1.msra.mxu0 0.0
  %145 = vmatprep.subr.mxu0 0.0
  %146 = vmatpush1.msra.mxu0 0.0
  %147 = vmatprep.subr.mxu0 0.0
  %148 = vmatpush1.msra.mxu0 0.0
  %149 = vmatprep.subr.mxu0 0.0
  %150 = vmatpush1.msra.mxu0 0.0
  %151 = vmatprep.subr.mxu0 0.0
  %152 = vmatpush1.msra.mxu0 0.0
  %153 = vmatprep.subr.mxu0 0.0
  %154 = vmatpush1.msra.mxu0 0.0
  %155 = vmatprep.subr.mxu0 0.0
  %156 = vmatpush1.msra.mxu0 0.0
  %157 = vmatprep.subr.mxu0 0.0
  %158 = vmatpush1.msra.mxu0 0.0
  %159 = vmatprep.subr.mxu0 0.0
  %160 = vmatpush1.msra.mxu0 0.0
  %161 = vmatprep.subr.mxu0 0.0
  %162 = vmatpush1.msra.mxu0 0.0
  %163 = vmatprep.subr.mxu0 0.0
  %164 = vmatpush1.msra.mxu0 0.0
  %165 = vmatprep.subr.mxu0 0.0
  %166 = vmatpush1.msra.mxu0 0.0
  %167 = vmatprep.subr.mxu0 0.0
  %168 = vmatpush1.msra.mxu0 0.0
  %169 = vmatprep.subr.mxu0 0.0
  %170 = vmatpush1.msra.mxu0 0.0
  %171 = vmatprep.subr.mxu0 0.0
  %172 = vmatpush1.msra.mxu0 0.0
  %173 = vmatprep.subr.mxu0 0.0
  %174 = vmatpush1.msra.mxu0 0.0
  %175 = vmatprep.subr.mxu0 0.0
  %176 = vmatpush1.msra.mxu0 0.0
  %177 = vmatprep.subr.mxu0 0.0
  %178 = vmatpush1.msra.mxu0 0.0
  %179 = vmatprep.subr.mxu0 0.0
  %180 = vmatpush1.msra.mxu0 0.0
  %181 = vmatprep.mubr.f32.mxu0 0.0
  %182 = vmatmul.mubr.f32.gmra.mrb[0].mxu0 %v115
  %v183 = vpop.f32.mrb[0].mxu0
  %v184 = vadd.f32 %v111, %v183
  %v185 = vpop.f32.mrb[0].mxu0
  %186 = vdwg.mxu0
  %187 = vst [vmem:[%s5] sm:$0xff] %v184
  // Predicated region
  $region22: #{simple_mlp.1} parent=0 // pred_check
    _
  $region23: #{simple_mlp.1} parent=0 // pred_check_branch
    %189 = sbr.rel (0) target = $region25
  $region24: #{simple_mlp.1} parent=0 // pred_region
    _
  $region25: #{simple_mlp.1} parent=0 // pred_fallthru
    _
  // Predicated region
  $region26: #{simple_mlp.1} parent=0 // pred_check
    _
  $region27: #{simple_mlp.1} parent=0 // pred_check_branch
    %191 = sbr.rel (0) target = $region29
  $region28: #{simple_mlp.1} parent=0 // pred_region
    _
  $region29: #{simple_mlp.1} parent=0 // pred_fallthru
    _

</llo_original>
